<compile_context>
chip_gen: v5e
topology: v5e:2x2
jax: 0.10.0
libtpu: 0.0.40
codegen_flags: <defaults>
</compile_context>

<pallas_src>
import jax
import jax.numpy as jnp
from jax.experimental import pallas as pl
from jax.experimental.pallas import tpu as pltpu


def _linear_gated_kernel(x_ref, pot_ref, tresh_ref, decay_ref,
                         gated_out_ref, pot_out_ref):
    # Whole-tile elementwise hot path on the VPU.
    potential = pot_ref[...] + x_ref[...]                 # potential + activated
    tresh = tresh_ref[...]                                # (1, TN), broadcasts over rows
    decay = decay_ref[...]

    gated = jnp.maximum(potential - tresh, 0.0)           # F.relu(potential - tresh)
    # post_gated = gated * 0 -> contributes nothing.
    # (gated == 0) <=> (potential <= tresh); select avoids the cast + extra mul.
    decayed = jnp.where(potential <= tresh, potential * decay, 0.0)

    gated_out_ref[...] = gated
    pot_out_ref[...] = jnp.maximum(decayed, 0.0)          # F.relu(new_potential)


def _pick_tile(dim, preferred, align):
    """Full extent if small (always legal); otherwise an aligned tile <= preferred."""
    if dim <= preferred:
        return dim
    return max((preferred // align) * align, align)


def linear_gated(x, potential, tresh, decay_rate, *, tb_pref=512, tn_pref=1024):
    """x, potential: (batch, out) f32; tresh, decay_rate: (out,) f32."""
    batch, out = x.shape
    tresh2d = tresh.reshape(1, out).astype(jnp.float32)
    decay2d = decay_rate.reshape(1, out).astype(jnp.float32)

    # Lane-dense tiling: TN multiple of 128, TB multiple of 8, <= ~2 MiB f32/tile
    # so 4 streams x double-buffer fits comfortably in v7x's 64 MiB VMEM too.
    tb = _pick_tile(batch, tb_pref, 8)
    tn = _pick_tile(out, tn_pref, 128)
    grid = (pl.cdiv(batch, tb), pl.cdiv(out, tn))

    tile_spec = pl.BlockSpec((tb, tn), lambda i, j: (i, j))
    row_spec = pl.BlockSpec((1, tn), lambda i, j: (0, j))

    nbytes = batch * out * 4
    cost = pl.CostEstimate(flops=6 * batch * out,
                           transcendentals=0,
                           bytes_accessed=4 * nbytes)   # 2 reads + 2 writes of (batch,out) f32

    out_shapes = (
        jax.ShapeDtypeStruct((batch, out), jnp.float32),  # gated
        jax.ShapeDtypeStruct((batch, out), jnp.float32),  # new potential
    )
    return pl.pallas_call(
        _linear_gated_kernel,
        out_shape=out_shapes,
        grid=grid,
        in_specs=[tile_spec, tile_spec, row_spec, row_spec],
        out_specs=(tile_spec, tile_spec),
        # potential (arg 1) aliases the new-potential output (out 1): in-place state update.
        input_output_aliases={1: 1},
        compiler_params=pltpu.CompilerParams(
            dimension_semantics=("parallel", "parallel"),
            vmem_limit_bytes=64 * 1024 * 1024,
        ),
        cost_estimate=cost,
    )(x, potential, tresh2d, decay2d)


def linear_gated_ref(x, potential, tresh, decay_rate):
    """Pure-JAX reference mirroring the PyTorch forward exactly."""
    potential = potential + x
    gated = jnp.maximum(potential - tresh[None, :], 0.0)
    post_gated = gated * 0.0
    non_gated = potential * (gated == 0.0).astype(jnp.float32)
    new_potential = post_gated + non_gated * decay_rate[None, :]
    return gated, jnp.maximum(new_potential, 0.0)


if __name__ == "__main__":
    batch, out = 8, 256   # small demo shapes; kernel tiles/scales to large (batch, out)

    key = jax.random.PRNGKey(0)
    k_tresh, k_decay, k_x, k_pot = jax.random.split(key, 4)

    # Deterministic parameter init matching the PyTorch __init__ distributions:
    #   tresh      = |U[0,1)| * 0.04 + 0.0
    #   decay_rate = |U[0,1)| * 0.5  + 0.4
    tresh = jnp.abs(jax.random.uniform(k_tresh, (out,), jnp.float32)) * 0.04 + 0.0
    decay_rate = jnp.abs(jax.random.uniform(k_decay, (out,), jnp.float32)) * 0.5 + 0.4

    x = jax.random.normal(k_x, (batch, out), jnp.float32)
    potential = jnp.abs(jax.random.normal(k_pot, (batch, out), jnp.float32))

    gated, new_pot = linear_gated(x, potential, tresh, decay_rate)
    jax.block_until_ready((gated, new_pot))

    gated_r, new_pot_r = linear_gated_ref(x, potential, tresh, decay_rate)
    assert jnp.allclose(gated, gated_r, atol=1e-6), "gated mismatch"
    assert jnp.allclose(new_pot, new_pot_r, atol=1e-6), "potential mismatch"

    print("KERNEL_OK")
</pallas_src>

<mosaic_0001>
module attributes {stable_mosaic.version = 11 : i64} {
  func.func @_linear_gated_kernel(%arg0: i32, %arg1: i32, %arg2: memref<8x256xf32, #tpu.memory_space<vmem>>, %arg3: memref<8x256xf32, #tpu.memory_space<vmem>>, %arg4: memref<1x256xf32, #tpu.memory_space<vmem>>, %arg5: memref<1x256xf32, #tpu.memory_space<vmem>>, %arg6: memref<8x256xf32, #tpu.memory_space<vmem>>, %arg7: memref<8x256xf32, #tpu.memory_space<vmem>>) attributes {dimension_semantics = [#tpu.dimension_semantics<parallel>, #tpu.dimension_semantics<parallel>], iteration_bounds = array<i64: 1, 1>, scalar_prefetch = 0 : i64, scratch_operands = 0 : i64, tpu.core_type = #tpu.core_type<tc>, window_params = [{transform_indices = @transform_0, window_bounds = array<i64: 8, 256>}, {transform_indices = @transform_1, window_bounds = array<i64: 8, 256>}, {transform_indices = @transform_2, window_bounds = array<i64: 1, 256>}, {transform_indices = @transform_3, window_bounds = array<i64: 1, 256>}, {transform_indices = @transform_4, window_bounds = array<i64: 8, 256>}, {transform_indices = @transform_5, window_bounds = array<i64: 8, 256>}]} {
    %c0 = arith.constant 0 : index
    %c0_0 = arith.constant 0 : index
    %0 = vector.load %arg3[%c0, %c0_0] : memref<8x256xf32, #tpu.memory_space<vmem>>, vector<8x256xf32>
    %c0_1 = arith.constant 0 : index
    %c0_2 = arith.constant 0 : index
    %1 = vector.load %arg2[%c0_1, %c0_2] : memref<8x256xf32, #tpu.memory_space<vmem>>, vector<8x256xf32>
    %2 = arith.addf %0, %1 : vector<8x256xf32>
    %c0_3 = arith.constant 0 : index
    %c0_4 = arith.constant 0 : index
    %3 = vector.load %arg4[%c0_3, %c0_4] : memref<1x256xf32, #tpu.memory_space<vmem>>, vector<1x256xf32>
    %c0_5 = arith.constant 0 : index
    %c0_6 = arith.constant 0 : index
    %4 = vector.load %arg5[%c0_5, %c0_6] : memref<1x256xf32, #tpu.memory_space<vmem>>, vector<1x256xf32>
    %5 = vector.broadcast %3 : vector<1x256xf32> to vector<8x256xf32>
    %6 = arith.subf %2, %5 : vector<8x256xf32>
    %cst = arith.constant 0.000000e+00 : f32
    %7 = vector.broadcast %cst : f32 to vector<8x256xf32>
    %8 = arith.maximumf %6, %7 : vector<8x256xf32>
    %9 = vector.broadcast %3 : vector<1x256xf32> to vector<8x256xf32>
    %10 = arith.cmpf ole, %2, %9 : vector<8x256xf32>
    %11 = vector.broadcast %4 : vector<1x256xf32> to vector<8x256xf32>
    %12 = arith.mulf %2, %11 : vector<8x256xf32>
    %cst_7 = arith.constant 0.000000e+00 : f32
    %13 = vector.broadcast %cst_7 : f32 to vector<8x256xf32>
    %14 = arith.select %10, %12, %13 : vector<8x256xi1>, vector<8x256xf32>
    %c0_8 = arith.constant 0 : index
    %c0_9 = arith.constant 0 : index
    %15 = vector.load %arg6[%c0_8, %c0_9] : memref<8x256xf32, #tpu.memory_space<vmem>>, vector<8x256xf32>
    tpu.vector_store %arg6[%c0_8, %c0_9], %8 {strides = array<i32>} : memref<8x256xf32, #tpu.memory_space<vmem>>, vector<8x256xf32>,
    %cst_10 = arith.constant 0.000000e+00 : f32
    %16 = vector.broadcast %cst_10 : f32 to vector<8x256xf32>
    %17 = arith.maximumf %14, %16 : vector<8x256xf32>
    %c0_11 = arith.constant 0 : index
    %c0_12 = arith.constant 0 : index
    %18 = vector.load %arg7[%c0_11, %c0_12] : memref<8x256xf32, #tpu.memory_space<vmem>>, vector<8x256xf32>
    tpu.vector_store %arg7[%c0_11, %c0_12], %17 {strides = array<i32>} : memref<8x256xf32, #tpu.memory_space<vmem>>, vector<8x256xf32>,
    return
  }
  func.func @transform_0(%arg0: i32, %arg1: i32) -> (i32, i32) {
    %c0_i32 = arith.constant 0 : i32
    return %arg0, %arg1 : i32, i32
  }
  func.func @transform_1(%arg0: i32, %arg1: i32) -> (i32, i32) {
    %c0_i32 = arith.constant 0 : i32
    return %arg0, %arg1 : i32, i32
  }
  func.func @transform_2(%arg0: i32, %arg1: i32) -> (i32, i32) {
    %c0_i32 = arith.constant 0 : i32
    %c0_i32_0 = arith.constant 0 : i32
    return %c0_i32, %arg1 : i32, i32
  }
  func.func @transform_3(%arg0: i32, %arg1: i32) -> (i32, i32) {
    %c0_i32 = arith.constant 0 : i32
    %c0_i32_0 = arith.constant 0 : i32
    return %c0_i32, %arg1 : i32, i32
  }
  func.func @transform_4(%arg0: i32, %arg1: i32) -> (i32, i32) {
    %c0_i32 = arith.constant 0 : i32
    return %arg0, %arg1 : i32, i32
  }
  func.func @transform_5(%arg0: i32, %arg1: i32) -> (i32, i32) {
    %c0_i32 = arith.constant 0 : i32
    return %arg0, %arg1 : i32, i32
  }
}

</mosaic_0001>

<llo_original>
// kernel: tpu_custom_call.1
$region0: #{tpu_custom_call.1}
  #allocation0 [shape = 'u32[]', space=smem, size = 0x4, offset = 0x4, fixed_abs, tag = 'smem constant byte address 0x4 - core index']
  #allocation1 [shape = 'u32[72,128]{1,0:T(1,128)}', space=vmem, size = 0x9000, scoped, tag = 'internal scratch']
  %s0 = inlined_call_operand.vmem [shape: f32[8,256], index: 0, kind: input, shape index: {}]
  %s1 = inlined_call_operand.hbm [shape: f32[8,256], index: 1, kind: input, shape index: {}, may-alias: {1,5}]
  %s2 = inlined_call_operand.vmem [shape: f32[1,256], index: 2, kind: input, shape index: {}]
  %s3 = inlined_call_operand.vmem [shape: f32[1,256], index: 3, kind: input, shape index: {}]
  %s4 = inlined_call_operand.hbm [shape: f32[8,256], index: 4, kind: output, shape index: {0}]
  %s5 = inlined_call_operand.hbm [shape: f32[8,256], index: 5, kind: output, shape index: {1}, may-alias: {1,5}]
  %6 = xla_tuple %s4, %s5
  %s7 = sld [smem:[#allocation0]]
  $region38: #{tpu_custom_call.1} parent=0
    _
  %s9 = ssub.s32 1, %s7
  %s10 = scalar_select 0, %s9, %s7
  $region1: #{tpu_custom_call.1} parent=0
    #allocation2 [shape = 'u8[8192]{0}', space=vmem, size = 0x2000, scoped, tag = 'input window, operand 1, single buffered']
    #allocation3 [shape = 's32[1]{0}', space=sflag, size = 0x4, scoped, tag = 'scoped memory for tpu_custom_call.1']
    #allocation4 [shape = 's32[1]{0}', space=sflag, size = 0x4, scoped, tag = 'scoped memory for tpu_custom_call.1']
    #allocation5 [shape = 'u8[8192]{0}', space=vmem, size = 0x2000, scoped, tag = 'output window, operand 0, single buffered']
    #allocation6 [shape = 'u8[8192]{0}', space=vmem, size = 0x2000, scoped, tag = 'output window, operand 1, single buffered']
    #allocation7 [shape = 's32[1]{0}', space=sflag, size = 0x4, scoped, tag = 'scoped memory for tpu_custom_call.1']
    %11 = vsyncpa [#allocation3], 0
    %12 = vsyncpa [#allocation4], 0
    %13 = vsyncpa [#allocation7], 0
    // Predicated region
    $region2: #{tpu_custom_call.1} parent=1 // pred_check
      _
    $region3: #{tpu_custom_call.1} parent=1 // pred_check_branch
      %15 = sbr.rel (0) target = $region5
    $region4: #{tpu_custom_call.1} parent=1 // pred_region
      _
    $region5: #{tpu_custom_call.1} parent=1 // pred_fallthru
      _
    // Predicated region
    $region6: #{tpu_custom_call.1} parent=1 // pred_check
      _
    $region7: #{tpu_custom_call.1} parent=1 // pred_check_branch
      %17 = sbr.rel (0) target = $region9
    $region8: #{tpu_custom_call.1} parent=1 // pred_region
      %19 = vsyncadd [#allocation3], 0
      %s21 = sshll.u32 %s1, 4
      %s22 = int_to_ptr.hbm [resolvable:$true] %s21
      %s23 = sshll.u32 [#allocation2], 4
      %s24 = int_to_ptr.vmem [resolvable:$true] %s23
      %26 = dma.hbm_to_vmem [thread:$0]  %s22, 256, %s24, [#allocation3]
    $region9: #{tpu_custom_call.1} parent=1 // pred_fallthru
      _
    // Predicated region
    $region10: #{tpu_custom_call.1} parent=1 // pred_check
      _
    $region11: #{tpu_custom_call.1} parent=1 // pred_check_branch
      %28 = sbr.rel (0) target = $region13
    $region12: #{tpu_custom_call.1} parent=1 // pred_region
      _
    $region13: #{tpu_custom_call.1} parent=1 // pred_fallthru
      _
    // Predicated region
    $region14: #{tpu_custom_call.1} parent=1 // pred_check
      _
    $region15: #{tpu_custom_call.1} parent=1 // pred_check_branch
      %30 = sbr.rel (0) target = $region17
    $region16: #{tpu_custom_call.1} parent=1 // pred_region
      _
    $region17: #{tpu_custom_call.1} parent=1 // pred_fallthru
      _
    // Predicated region
    $region18: #{tpu_custom_call.1} parent=1 // pred_check
      _
    $region19: #{tpu_custom_call.1} parent=1 // pred_check_branch
      %32 = sbr.rel (0) target = $region21
    $region20: #{tpu_custom_call.1} parent=1 // pred_region
      %34 = dma.done [#allocation3], 256
    $region21: #{tpu_custom_call.1} parent=1 // pred_fallthru
      _
    %v35 = vld [vmem:[#allocation2] sm:$0xff]
    %v36 = vld [vmem:[#allocation2 + $0x8] sm:$0xff]
    %v37 = vld [vmem:[%s0] sm:$0xff]
    %v38 = vld [vmem:[%s0 + $0x8] sm:$0xff]
    %v39 = vadd.f32 %v35, %v37
    %v40 = vadd.f32 %v36, %v38
    %v41 = vld [vmem:[%s2] sm:$0x3]
    %v42 = vld [vmem:[%s3] sm:$0x3]
    %v44 = vperm.slane %v41, 0
    %v45 = vperm.slane %v41, 1
    %v48 = vsub.f32 %v39, %v44
    %v49 = vsub.f32 %v40, %v45
    %v50 = vmax.f32 %v48, 0.0
    %v51 = vmax.f32 %v49, 0.0
    %vm52 = vcmp.le.f32.partialorder %v39, %v44
    %vm53 = vcmp.le.f32.partialorder %v40, %v45
    %v55 = vperm.slane %v42, 0
    %v56 = vperm.slane %v42, 1
    %v59 = vmul.f32 %v39, %v55
    %v60 = vmul.f32 %v40, %v56
    %v61 = vsel %vm52, %v59, 0.0
    %v62 = vsel %vm53, %v60, 0.0
    %63 = vst [vmem:[#allocation5] sm:$0xff] %v50
    %64 = vst [vmem:[#allocation5 + $0x8] sm:$0xff] %v51
    %v65 = vmax.f32 %v61, 0.0
    %v66 = vmax.f32 %v62, 0.0
    %67 = vst [vmem:[#allocation6] sm:$0xff] %v65
    %68 = vst [vmem:[#allocation6 + $0x8] sm:$0xff] %v66
    // Predicated region
    $region22: #{tpu_custom_call.1} parent=1 // pred_check
      _
    $region23: #{tpu_custom_call.1} parent=1 // pred_check_branch
      %70 = sbr.rel (0) target = $region25
    $region24: #{tpu_custom_call.1} parent=1 // pred_region
      %72 = vsyncadd [#allocation4], 0
      %s74 = sshll.u32 [#allocation5], 4
      %s75 = int_to_ptr.vmem [resolvable:$true] %s74
      %s76 = sshll.u32 %s4, 4
      %s77 = int_to_ptr.hbm [resolvable:$true] %s76
      %79 = dma.vmem_to_hbm [thread:$0]  %s75, 256, %s77, [#allocation4]
    $region25: #{tpu_custom_call.1} parent=1 // pred_fallthru
      _
    // Predicated region
    $region26: #{tpu_custom_call.1} parent=1 // pred_check
      _
    $region27: #{tpu_custom_call.1} parent=1 // pred_check_branch
      %81 = sbr.rel (0) target = $region29
    $region28: #{tpu_custom_call.1} parent=1 // pred_region
      %83 = vsyncadd [#allocation7], 0
      %s85 = sshll.u32 [#allocation6], 4
      %s86 = int_to_ptr.vmem [resolvable:$true] %s85
      %s87 = sshll.u32 %s5, 4
      %s88 = int_to_ptr.hbm [resolvable:$true] %s87
      %90 = dma.vmem_to_hbm [thread:$0]  %s86, 256, %s88, [#allocation7]
    $region29: #{tpu_custom_call.1} parent=1 // pred_fallthru
      _
    // Predicated region
    $region30: #{tpu_custom_call.1} parent=1 // pred_check
      _
    $region31: #{tpu_custom_call.1} parent=1 // pred_check_branch
      %92 = sbr.rel (0) target = $region33
    $region32: #{tpu_custom_call.1} parent=1 // pred_region
      %94 = dma.done [#allocation4], 256
    $region33: #{tpu_custom_call.1} parent=1 // pred_fallthru
      _
    // Predicated region
    $region34: #{tpu_custom_call.1} parent=1 // pred_check
      _
    $region35: #{tpu_custom_call.1} parent=1 // pred_check_branch
      %96 = sbr.rel (0) target = $region37
    $region36: #{tpu_custom_call.1} parent=1 // pred_region
      %98 = dma.done [#allocation7], 256
    $region37: #{tpu_custom_call.1} parent=1 // pred_fallthru
      _
    %99 = vsyncpa [#allocation3], 1
    %100 = vsyncpa [#allocation4], 1
    %101 = vsyncpa [#allocation7], 1

</llo_original>
